<compile_context>
chip_gen: v7x
topology: tpu7x:2x2x1
jax: 0.10.0
libtpu: 0.0.40
codegen_flags: <defaults>
</compile_context>

<pallas_src>
import functools

import jax
import jax.numpy as jnp
from jax.experimental import pallas as pl
from jax.experimental.pallas import tpu as pltpu

_LANES = 128
_SUBLANES = 8
_VREG_ELEMS = _SUBLANES * _LANES          # 1024
_CHUNK_ROWS = 256                         # per-loop-iter slice: 256*128*4B = 128 KiB
_MAX_TILE_ROWS = 8192                     # 8192*128*4B = 4 MiB f32 per logits buffer
_FAST_PATH_ELEMS = 1 << 16                # below this, plain jnp beats a kernel launch


def _round_up(v: int, m: int) -> int:
    return -(-v // m) * m


def _bce_elementwise(x, y):
    """Numerically stable BCE-with-logits (PyTorch formulation), f32."""
    x = x.astype(jnp.float32)
    y = y.astype(jnp.float32)
    return jnp.maximum(x, 0.0) - x * y + jnp.log1p(jnp.exp(-jnp.abs(x)))


def _bce_partial_kernel(x_ref, y_ref, out_ref, *, valid_rows):
    """Per-grid-step (8,128) f32 partial sum of BCE loss over a (tm,128) tile."""
    i = pl.program_id(0)
    tm = x_ref.shape[0]
    n_chunks = tm // _CHUNK_ROWS

    def tile_sum(masked):
        # Hoisted iota (only traced for the single masked tile).
        base_iota = (
            jax.lax.broadcasted_iota(jnp.int32, (_CHUNK_ROWS, _LANES), 0)
            if masked else None)
        valid_in_tile = valid_rows - i * tm  # scalar, only used when masked

        def body(c, acc):
            r0 = pl.multiple_of(c * _CHUNK_ROWS, _CHUNK_ROWS)
            x = x_ref[pl.ds(r0, _CHUNK_ROWS), :].astype(jnp.float32)
            y = y_ref[pl.ds(r0, _CHUNK_ROWS), :].astype(jnp.float32)
            per = jnp.maximum(x, 0.0) - x * y + jnp.log1p(jnp.exp(-jnp.abs(x)))
            if masked:
                # Discard rows a partial last block read out of bounds
                # (garbage, possibly NaN/Inf — the select removes them).
                per = jnp.where(base_iota + r0 < valid_in_tile, per, 0.0)
            # Fold the chunk onto one (8,128) vreg with pure VPU adds.
            folded = per.reshape(_CHUNK_ROWS // _SUBLANES, _SUBLANES,
                                 _LANES).sum(axis=0)
            return acc + folded

        return jax.lax.fori_loop(
            0, n_chunks, body, jnp.zeros((_SUBLANES, _LANES), jnp.float32))

    if valid_rows % tm == 0:
        # Grid divides evenly: no masking anywhere (statically dead branch).
        out_ref[...] = tile_sum(False)[None]
    else:
        is_last = i == pl.num_programs(0) - 1

        @pl.when(jnp.logical_not(is_last))
        def _():
            out_ref[...] = tile_sum(False)[None]

        @pl.when(is_last)
        def _():
            out_ref[...] = tile_sum(True)[None]


def bce_with_logits_loss(y_s: jax.Array, label_y: jax.Array) -> jax.Array:
    """Mean BCE-with-logits. y_s: (B, N) logits; label_y: (B, N, 1) targets."""
    target = jnp.squeeze(label_y, axis=-1)  # glue: matches label.y.squeeze(-1)
    assert y_s.shape == target.shape, (y_s.shape, target.shape)
    total = int(y_s.size)

    # Fast path: pallas_call launch overhead dominates for tiny inputs.
    if total < _FAST_PATH_ELEMS:
        return jnp.sum(_bce_elementwise(y_s, target),
                       dtype=jnp.float32) / jnp.float32(total)

    x_flat = y_s.reshape(-1)
    # Binary targets: bf16 is exact for {0,1} and halves label HBM traffic.
    # TODO(synk): soft targets would only be bf16-approximate here.
    y_flat = target.reshape(-1).astype(jnp.bfloat16)

    # 1024-aligned prefix streams through the kernel; the <1024-element
    # remainder is folded in with plain jnp (no padded copy of the inputs).
    prefix = (total // _VREG_ELEMS) * _VREG_ELEMS
    rem = total - prefix

    rem_sum = jnp.float32(0.0)
    if rem:
        x_rem = jax.lax.slice(x_flat, (prefix,), (total,))
        y_rem = jax.lax.slice(y_flat, (prefix,), (total,))
        rem_sum = jnp.sum(_bce_elementwise(x_rem, y_rem), dtype=jnp.float32)
        x_main = jax.lax.slice(x_flat, (0,), (prefix,))
        y_main = jax.lax.slice(y_flat, (0,), (prefix,))
    else:
        x_main, y_main = x_flat, y_flat

    rows = prefix // _LANES                 # multiple of 8 by construction
    x2 = x_main.reshape(rows, _LANES)
    y2 = y_main.reshape(rows, _LANES)

    # Tile choice: >= 2 (even) grid steps so the parallel axis can shard
    # across both v7x TensorCores; tiles capped at 8192 rows and rounded to a
    # multiple of the in-kernel chunk size.
    n_tiles = max(2, pl.cdiv(rows, _MAX_TILE_ROWS))
    if n_tiles % 2:
        n_tiles += 1
    tm = min(_MAX_TILE_ROWS, _round_up(pl.cdiv(rows, n_tiles), _CHUNK_ROWS))
    grid = (pl.cdiv(rows, tm),)

    kern = functools.partial(_bce_partial_kernel, valid_rows=rows)

    cost = pl.CostEstimate(
        flops=6 * total,
        transcendentals=2 * total,              # exp + log1p per element
        bytes_accessed=prefix * (4 + 2) + grid[0] * _VREG_ELEMS * 4,
    )

    partials = pl.pallas_call(
        kern,
        out_shape=jax.ShapeDtypeStruct((grid[0], _SUBLANES, _LANES),
                                       jnp.float32),
        grid_spec=pltpu.PrefetchScalarGridSpec(
            num_scalar_prefetch=0,
            grid=grid,
            in_specs=[
                pl.BlockSpec((tm, _LANES), lambda i: (i, 0)),
                pl.BlockSpec((tm, _LANES), lambda i: (i, 0)),
            ],
            out_specs=pl.BlockSpec((1, _SUBLANES, _LANES),
                                   lambda i: (i, 0, 0)),
        ),
        compiler_params=pltpu.CompilerParams(
            dimension_semantics=("parallel",),
            vmem_limit_bytes=32 * 1024 * 1024,
        ),
        cost_estimate=cost,
    )(x2, y2)

    # Tiny final reduce + mean in plain JAX (grid * 1024 f32 elements).
    return (jnp.sum(partials, dtype=jnp.float32) + rem_sum) / jnp.float32(total)


def _reference(y_s, label_y):
    x = y_s.astype(jnp.float32)
    y = jnp.squeeze(label_y, axis=-1).astype(jnp.float32)
    return jnp.mean(jnp.maximum(x, 0.0) - x * y + jnp.log1p(jnp.exp(-jnp.abs(x))))


if __name__ == "__main__":
    key = jax.random.PRNGKey(0)
    ks = jax.random.split(key, 6)

    # Case 1: small shape consistent with the module (jnp fast path).
    B, N = 8, 128
    y_s = jax.random.normal(ks[0], (B, N), dtype=jnp.float32)
    label_y = (jax.random.uniform(ks[1], (B, N, 1)) > 0.5).astype(jnp.float32)
    loss = bce_with_logits_loss(y_s, label_y)
    jax.block_until_ready(loss)
    ref = _reference(y_s, label_y)
    assert jnp.allclose(loss, ref, atol=1e-5, rtol=1e-5), (loss, ref)

    # Case 2: large enough to take the Pallas path, evenly tiled (grid=(2,)).
    B2, N2 = 64, 2048
    y_s2 = jax.random.normal(ks[2], (B2, N2), dtype=jnp.float32)
    label_y2 = (jax.random.uniform(ks[3], (B2, N2, 1)) > 0.5).astype(jnp.float32)
    loss2 = bce_with_logits_loss(y_s2, label_y2)
    jax.block_until_ready(loss2)
    ref2 = _reference(y_s2, label_y2)
    assert jnp.allclose(loss2, ref2, atol=1e-5, rtol=1e-5), (loss2, ref2)

    # Case 3: ragged Pallas path (masked last tile + jnp remainder fold-in).
    B3, N3 = 70, 1031
    y_s3 = jax.random.normal(ks[4], (B3, N3), dtype=jnp.float32)
    label_y3 = (jax.random.uniform(ks[5], (B3, N3, 1)) > 0.5).astype(jnp.float32)
    loss3 = bce_with_logits_loss(y_s3, label_y3)
    jax.block_until_ready(loss3)
    ref3 = _reference(y_s3, label_y3)
    assert jnp.allclose(loss3, ref3, atol=1e-5, rtol=1e-5), (loss3, ref3)

    print("KERNEL_OK")
</pallas_src>

<mosaic_0001>
module attributes {stable_mosaic.version = 11 : i64} {
  func.func @_bce_partial_kernel(%arg0: i32, %arg1: memref<512x128xf32, #tpu.memory_space<vmem>>, %arg2: memref<512x128xbf16, #tpu.memory_space<vmem>>, %arg3: memref<1x8x128xf32, #tpu.memory_space<vmem>>) attributes {dimension_semantics = [#tpu.dimension_semantics<parallel>], iteration_bounds = array<i64: 2>, scalar_prefetch = 0 : i64, scratch_operands = 0 : i64, tpu.core_type = #tpu.core_type<tc>, window_params = [{transform_indices = @transform_0, window_bounds = array<i64: 512, 128>}, {transform_indices = @transform_1, window_bounds = array<i64: 512, 128>}, {transform_indices = @transform_2, window_bounds = array<i64: 1, 8, 128>}]} {
    %cst = arith.constant 0.000000e+00 : f32
    %0 = vector.broadcast %cst : f32 to vector<8x128xf32>
    %c0_i32 = arith.constant 0 : i32
    %c2_i32 = arith.constant 2 : i32
    %1 = arith.addi %c0_i32, %c2_i32 : i32
    %c1_i32 = arith.constant 1 : i32
    %2 = scf.for %arg4 = %c0_i32 to %1 step %c1_i32 iter_args(%arg5 = %0) -> (vector<8x128xf32>)  : i32 {
      %c256_i32 = arith.constant 256 : i32
      %5 = arith.muli %arg4, %c256_i32 : i32
      %6 = tpu.assume_multiple %5, 256 : i32
      %7 = arith.index_cast %6 : i32 to index
      %c0_3 = arith.constant 0 : index
      %8 = vector.load %arg1[%7, %c0_3] : memref<512x128xf32, #tpu.memory_space<vmem>>, vector<256x128xf32>
      %9 = arith.index_cast %6 : i32 to index
      %c0_4 = arith.constant 0 : index
      %10 = vector.load %arg2[%9, %c0_4] : memref<512x128xbf16, #tpu.memory_space<vmem>>, vector<256x128xbf16>
      %11 = arith.extf %10 : vector<256x128xbf16> to vector<256x128xf32>
      %cst_5 = arith.constant 0.000000e+00 : f32
      %12 = vector.broadcast %cst_5 : f32 to vector<256x128xf32>
      %13 = arith.maximumf %8, %12 : vector<256x128xf32>
      %14 = arith.mulf %8, %11 : vector<256x128xf32>
      %15 = arith.subf %13, %14 : vector<256x128xf32>
      %16 = math.absf %8 : vector<256x128xf32>
      %cst_6 = arith.constant 0.000000e+00 : f32
      %17 = vector.broadcast %cst_6 : f32 to vector<256x128xf32>
      %18 = arith.subf %17, %16 : vector<256x128xf32>
      %19 = math.exp %18 : vector<256x128xf32>
      %20 = math.log1p %19 : vector<256x128xf32>
      %21 = arith.addf %15, %20 : vector<256x128xf32>
      %22 = vector.shape_cast %21 : vector<256x128xf32> to vector<32x8x128xf32>
      %cst_7 = arith.constant dense<0.000000e+00> : vector<8x128xf32>
      %23 = vector.multi_reduction <add>, %22, %cst_7 [0] : vector<32x8x128xf32> to vector<8x128xf32>
      %24 = arith.addf %arg5, %23 : vector<8x128xf32>
      scf.yield %24 : vector<8x128xf32>
    }
    %c2_i32_0 = arith.constant 2 : i32
    %3 = vector.shape_cast %2 : vector<8x128xf32> to vector<1x8x128xf32>
    %c0 = arith.constant 0 : index
    %c0_1 = arith.constant 0 : index
    %c0_2 = arith.constant 0 : index
    %4 = vector.load %arg3[%c0, %c0_1, %c0_2] : memref<1x8x128xf32, #tpu.memory_space<vmem>>, vector<1x8x128xf32>
    tpu.vector_store %arg3[%c0, %c0_1, %c0_2], %3 {strides = array<i32>} : memref<1x8x128xf32, #tpu.memory_space<vmem>>, vector<1x8x128xf32>,
    return
  }
  func.func @transform_0(%arg0: i32) -> (i32, i32) {
    %c0_i32 = arith.constant 0 : i32
    %c0_i32_0 = arith.constant 0 : i32
    return %arg0, %c0_i32 : i32, i32
  }
  func.func @transform_1(%arg0: i32) -> (i32, i32) {
    %c0_i32 = arith.constant 0 : i32
    %c0_i32_0 = arith.constant 0 : i32
    return %arg0, %c0_i32 : i32, i32
  }
  func.func @transform_2(%arg0: i32) -> (i32, i32, i32) {
    %c0_i32 = arith.constant 0 : i32
    %c0_i32_0 = arith.constant 0 : i32
    %c0_i32_1 = arith.constant 0 : i32
    return %arg0, %c0_i32, %c0_i32_0 : i32, i32, i32
  }
}

</mosaic_0001>

<llo_original>
// kernel: tpu_custom_call.1
$region0: #{tpu_custom_call.1}
  #allocation0 [shape = 'u32[]', space=smem, size = 0x4, offset = 0x4, fixed_abs, tag = 'smem constant byte address 0x4 - core index']
  #allocation1 [shape = 'u32[144,128]{1,0:T(1,128)}', space=vmem, size = 0x12000, scoped, tag = 'internal scratch']
  %s0 = inlined_call_operand.hbm [shape: f32[1024,128], index: 0, kind: input, shape index: {}]
  %s1 = inlined_call_operand.hbm [shape: bf16[1024,128], index: 1, kind: input, shape index: {}]
  %s2 = inlined_call_operand.hbm [shape: f32[2,8,128], index: 2, kind: output, shape index: {}]
  %s3 = sld [smem:[#allocation0]]
  $region56: #{tpu_custom_call.1} parent=0
    _
  %s5 = ssub.s32 1, %s3
  %s6 = scalar_select 0, %s5, %s3
  $region1: #{tpu_custom_call.1} parent=0
    #allocation2 [shape = 'u8[524288]{0}', space=vmem, size = 0x80000, scoped, tag = 'input window, operand 0']
    #allocation3 [shape = 's32[2]{0}', space=sflag, size = 0x8, scoped, tag = 'scoped memory for tpu_custom_call.1']
    #allocation4 [shape = 's32[2]{0}', space=sflag, size = 0x8, scoped, tag = 'scoped memory for tpu_custom_call.1']
    #allocation5 [shape = 'u8[262144]{0}', space=vmem, size = 0x40000, scoped, tag = 'input window, operand 1']
    #allocation6 [shape = 's32[2]{0}', space=sflag, size = 0x8, scoped, tag = 'scoped memory for tpu_custom_call.1']
    #allocation7 [shape = 'u8[8192]{0}', space=vmem, size = 0x2000, scoped, tag = 'output window, operand 0']
    %7 = vsyncpa [#allocation3], 0
    %s8 = scalar_lea.sflag [#allocation3], 1
    %9 = vsyncpa %s8, 0
    %10 = vsyncpa [#allocation6], 0
    %s11 = scalar_lea.sflag [#allocation6], 1
    %12 = vsyncpa %s11, 0
    %13 = vsyncpa [#allocation4], 0
    %s14 = scalar_lea.sflag [#allocation4], 1
    %15 = vsyncpa %s14, 0
    loop: start=0, step=1, limit=4
    $region2: #{tpu_custom_call.1} parent=1 // loop_pre_header
      _
    $region3: #{tpu_custom_call.1} parent=1 // loop_header
      %s17 = sphi 0, %s21
      %p18 = scmp.ge.s32.totalorder %s17, 4
      %s27 = sphi 0, %s29
      %s30 = sphi 0, %s27
      %s31 = sphi 0, %s30
      %s47 = sphi 0, %s31
      %s53 = sphi 0, %s55
      %s56 = sphi 0, %s53
      %s57 = sphi 0, %s56
      %s73 = sphi 0, %s57
      %s79 = sphi 0, %s81
      %s82 = sphi 0, %s79
      %s83 = sphi 0, %s82
      %s99 = sphi 0, %s83
    $region4: #{tpu_custom_call.1} parent=1 // loop_header_branch
      %20 = sbr.rel (%p18) target = $region8
    $region5: #{tpu_custom_call.1} parent=1 // loop_body
      %s22 = ssub.s32 %s17, 1
      %s23 = ssub.s32 %s17, 2
      %s24 = sadd.s32 %s17, 1
      %s25 = ssub.s32 %s17, %s24
      %p26 = scmp.eq.s32.totalorder %s25, 0
      %s28 = sadd.s32 %s27, 1
      %s29 = scalar_select %p26, %s27, %s28
      %p32 = pneg %p26
      %p33 = scmp.eq.s32.totalorder %s17, 1
      %p34 = por %p32, %p33
      %p35 = scmp.ne.s32.totalorder %s27, %s30
      %p36 = scmp.eq.s32.totalorder %s17, 0
      %p37 = por %p35, %p36
      %p38 = scmp.ne.s32.totalorder %s27, %s30
      %p39 = scmp.eq.s32.totalorder %s22, 1
      %p40 = por %p38, %p39
      %p41 = scmp.ne.s32.totalorder %s30, %s31
      %p42 = scmp.eq.s32.totalorder %s22, 0
      %p43 = por %p41, %p42
      %p44 = scmp.ne.s32.totalorder %s30, %s31
      %p45 = scmp.eq.s32.totalorder %s23, 1
      %p46 = por %p44, %p45
      %p48 = scmp.ne.s32.totalorder %s31, %s47
      %p49 = scmp.eq.s32.totalorder %s23, 0
      %p50 = por %p48, %p49
      %s51 = ssub.s32 %s17, %s24
      %p52 = scmp.eq.s32.totalorder %s51, 0
      %s54 = sadd.s32 %s53, 1
      %s55 = scalar_select %p52, %s53, %s54
      %p58 = pneg %p52
      %p59 = scmp.eq.s32.totalorder %s17, 1
      %p60 = por %p58, %p59
      %p61 = scmp.ne.s32.totalorder %s53, %s56
      %p62 = scmp.eq.s32.totalorder %s17, 0
      %p63 = por %p61, %p62
      %p64 = scmp.ne.s32.totalorder %s53, %s56
      %p65 = scmp.eq.s32.totalorder %s22, 1
      %p66 = por %p64, %p65
      %p67 = scmp.ne.s32.totalorder %s56, %s57
      %p68 = scmp.eq.s32.totalorder %s22, 0
      %p69 = por %p67, %p68
      %p70 = scmp.ne.s32.totalorder %s56, %s57
      %p71 = scmp.eq.s32.totalorder %s23, 1
      %p72 = por %p70, %p71
      %p74 = scmp.ne.s32.totalorder %s57, %s73
      %p75 = scmp.eq.s32.totalorder %s23, 0
      %p76 = por %p74, %p75
      %s77 = ssub.s32 %s17, %s24
      %p78 = scmp.eq.s32.totalorder %s77, 0
      %s80 = sadd.s32 %s79, 1
      %s81 = scalar_select %p78, %s79, %s80
      %p84 = pneg %p78
      %p85 = scmp.eq.s32.totalorder %s17, 1
      %p86 = por %p84, %p85
      %p87 = scmp.ne.s32.totalorder %s79, %s82
      %p88 = scmp.eq.s32.totalorder %s17, 0
      %p89 = por %p87, %p88
      %p90 = scmp.ne.s32.totalorder %s79, %s82
      %p91 = scmp.eq.s32.totalorder %s22, 1
      %p92 = por %p90, %p91
      %p93 = scmp.ne.s32.totalorder %s82, %s83
      %p94 = scmp.eq.s32.totalorder %s22, 0
      %p95 = por %p93, %p94
      %p96 = scmp.ne.s32.totalorder %s82, %s83
      %p97 = scmp.eq.s32.totalorder %s23, 1
      %p98 = por %p96, %p97
      %p100 = scmp.ne.s32.totalorder %s83, %s99
      %p101 = scmp.eq.s32.totalorder %s23, 0
      %p102 = por %p100, %p101
      %p103 = scmp.le.s32.totalorder 1, %s17
      %p104 = scmp.lt.s32.totalorder %s17, 3
      %p105 = pnand %p103, %p104
      %p106 = pneg %p105
      // Predicated region
      $region9: #{tpu_custom_call.1} parent=5 // pred_check
        _
      $region10: #{tpu_custom_call.1} parent=5 // pred_check_branch
        %108 = sbr.rel (%p105) target = $region12
      $region11: #{tpu_custom_call.1} parent=5 // pred_region
        %s109 = ssub.s32 %s17, 1
      $region12: #{tpu_custom_call.1} parent=5 // pred_fallthru
        _
      %p110 = scmp.lt.s32.totalorder %s17, 2
      // Predicated region
      $region13: #{tpu_custom_call.1} parent=5 // pred_check
        %p111 = pneg %p110
      $region14: #{tpu_custom_call.1} parent=5 // pred_check_branch
        %113 = sbr.rel (%p111) target = $region16
      $region15: #{tpu_custom_call.1} parent=5 // pred_region
        // Predicated region
        $region17: #{tpu_custom_call.1} parent=15 // pred_check
          %p114 = pneg %p37
        $region18: #{tpu_custom_call.1} parent=15 // pred_check_branch
          %116 = sbr.rel (%p114) target = $region20
        $region19: #{tpu_custom_call.1} parent=15 // pred_region
          %s117 = sand.u32 %s27, 1
          %s118 = scalar_lea.sflag [#allocation3], %s117
          %s119 = sand.u32 %s27, 1
          %s120 = smul.addr %s119, 512
          %s121 = scalar_lea.vmem [#allocation2], %s120
          %s122 = smul.u32 64, %s17
          %s124 = ssub.s32 8192, 8192
          %125 = vsyncadd %s118, %s124
          %s126 = smul.addr %s122, 128
          %s127 = scalar_lea.hbm %s0, %s126
          %s128 = sshll.u32 %s121, 4
          %s129 = int_to_ptr.vmem [resolvable:$true] %s128
          %134 = dma.hbm_to_vmem [thread:$0]  %s127, 8192, %s129, %s118, 128, 128, 8
        $region20: #{tpu_custom_call.1} parent=15 // pred_fallthru
          _
        // Predicated region
        $region21: #{tpu_custom_call.1} parent=15 // pred_check
          %p135 = pneg %p63
        $region22: #{tpu_custom_call.1} parent=15 // pred_check_branch
          %137 = sbr.rel (%p135) target = $region24
        $region23: #{tpu_custom_call.1} parent=15 // pred_region
          %s138 = sand.u32 %s53, 1
          %s139 = scalar_lea.sflag [#allocation6], %s138
          %s140 = sand.u32 %s53, 1
          %s141 = smul.addr %s140, 256
          %s142 = scalar_lea.vmem [#allocation5], %s141
          %s143 = smul.u32 64, %s17
          %s145 = ssub.s32 4096, 4096
          %146 = vsyncadd %s139, %s145
          %s147 = smul.addr %s143, 64
          %s148 = scalar_lea.hbm %s1, %s147
          %s149 = sshll.u32 %s142, 4
          %s150 = int_to_ptr.vmem [resolvable:$true] %s149
          %155 = dma.hbm_to_vmem [thread:$0]  %s148, 4096, %s150, %s139, 64, 64, 4
        $region24: #{tpu_custom_call.1} parent=15 // pred_fallthru
          _
      $region16: #{tpu_custom_call.1} parent=5 // pred_fallthru
        _
      %p156 = scmp.le.s32.totalorder 1, %s17
      %p157 = scmp.lt.s32.totalorder %s17, 3
      %p158 = pnand %p156, %p157
      %p159 = pneg %p158
      // Predicated region
      $region25: #{tpu_custom_call.1} parent=5 // pred_check
        _
      $region26: #{tpu_custom_call.1} parent=5 // pred_check_branch
        %161 = sbr.rel (%p158) target = $region28
      $region27: #{tpu_custom_call.1} parent=5 // pred_region
        %s162 = ssub.s32 %s17, 1
        %s163 = sand.u32 %s30, 1
        %s164 = scalar_lea.sflag [#allocation3], %s163
        %s165 = sand.u32 %s30, 1
        %s166 = smul.addr %s165, 512
        %s167 = scalar_lea.vmem [#allocation2], %s166
        // Predicated region
        $region29: #{tpu_custom_call.1} parent=27 // pred_check
          %p168 = pneg %p43
        $region30: #{tpu_custom_call.1} parent=27 // pred_check_branch
          %170 = sbr.rel (%p168) target = $region32
        $region31: #{tpu_custom_call.1} parent=27 // pred_region
          %171 = dma.done %s164, 8192
        $region32: #{tpu_custom_call.1} parent=27 // pred_fallthru
          _
        %s172 = sand.u32 %s56, 1
        %s173 = scalar_lea.sflag [#allocation6], %s172
        %s174 = sand.u32 %s56, 1
        %s175 = smul.addr %s174, 256
        %s176 = scalar_lea.vmem [#allocation5], %s175
        // Predicated region
        $region33: #{tpu_custom_call.1} parent=27 // pred_check
          %p177 = pneg %p69
        $region34: #{tpu_custom_call.1} parent=27 // pred_check_branch
          %179 = sbr.rel (%p177) target = $region36
        $region35: #{tpu_custom_call.1} parent=27 // pred_region
          %180 = dma.done %s173, 4096
        $region36: #{tpu_custom_call.1} parent=27 // pred_fallthru
          _
        %s181 = sand.u32 %s30, 1
        %s182 = scalar_lea.sflag [#allocation3], %s181
        %s183 = sand.u32 %s30, 1
        %s184 = smul.addr %s183, 512
        %s185 = scalar_lea.vmem [#allocation2], %s184
        %p186 = pneg %p43
        %p187 = pneg %p40
        %s188 = sand.u32 %s56, 1
        %s189 = scalar_lea.sflag [#allocation6], %s188
        %s190 = sand.u32 %s56, 1
        %s191 = smul.addr %s190, 256
        %s192 = scalar_lea.vmem [#allocation5], %s191
        %p193 = pneg %p69
        %p194 = pneg %p66
        %p195 = pneg %p95
        %p196 = pneg %p92
        %s197 = sand.u32 %s82, 1
        %s198 = scalar_lea.sflag [#allocation4], %s197
        %s199 = sand.u32 %s82, 1
        %s200 = smul.addr %s199, 8
        %s201 = scalar_lea.vmem [#allocation7], %s200
        %s202 = smul.u32 64, %s22
        %s203 = smul.u32 64, %s22
        loop: start=0, step=1, limit=2
        $region37: #{tpu_custom_call.1} parent=27 // loop_pre_header
          _
        $region38: #{tpu_custom_call.1} parent=27 // loop_header
          %s205 = sphi 0, %s209
          %p206 = scmp.ge.s32.totalorder %s205, 2
          %v210 = vphi 0.0, %v888
        $region39: #{tpu_custom_call.1} parent=27 // loop_header_branch
          %208 = sbr.rel (%p206) target = $region43
        $region40: #{tpu_custom_call.1} parent=27 // loop_body
          %s211 = smul.u32 %s205, 256
          %s212 = scalar_lea.vmem %s167, %s211 [#allocation2]
          %v213 = vld [vmem:[%s212] sm:$0xff]
          %v214 = vld [vmem:[%s212 + $0x8] sm:$0xff]
          %v215 = vld [vmem:[%s212 + $0x10] sm:$0xff]
          %v216 = vld [vmem:[%s212 + $0x18] sm:$0xff]
          %v217 = vld [vmem:[%s212 + $0x20] sm:$0xff]
          %v218 = vld [vmem:[%s212 + $0x28] sm:$0xff]
          %v219 = vld [vmem:[%s212 + $0x30] sm:$0xff]
          %v220 = vld [vmem:[%s212 + $0x38] sm:$0xff]
          %v221 = vld [vmem:[%s212 + $0x40] sm:$0xff]
          %v222 = vld [vmem:[%s212 + $0x48] sm:$0xff]
          %v223 = vld [vmem:[%s212 + $0x50] sm:$0xff]
          %v224 = vld [vmem:[%s212 + $0x58] sm:$0xff]
          %v225 = vld [vmem:[%s212 + $0x60] sm:$0xff]
          %v226 = vld [vmem:[%s212 + $0x68] sm:$0xff]
          %v227 = vld [vmem:[%s212 + $0x70] sm:$0xff]
          %v228 = vld [vmem:[%s212 + $0x78] sm:$0xff]
          %v229 = vld [vmem:[%s212 + $0x80] sm:$0xff]
          %v230 = vld [vmem:[%s212 + $0x88] sm:$0xff]
          %v231 = vld [vmem:[%s212 + $0x90] sm:$0xff]
          %v232 = vld [vmem:[%s212 + $0x98] sm:$0xff]
          %v233 = vld [vmem:[%s212 + $0xa0] sm:$0xff]
          %v234 = vld [vmem:[%s212 + $0xa8] sm:$0xff]
          %v235 = vld [vmem:[%s212 + $0xb0] sm:$0xff]
          %v236 = vld [vmem:[%s212 + $0xb8] sm:$0xff]
          %v237 = vld [vmem:[%s212 + $0xc0] sm:$0xff]
          %v238 = vld [vmem:[%s212 + $0xc8] sm:$0xff]
          %v239 = vld [vmem:[%s212 + $0xd0] sm:$0xff]
          %v240 = vld [vmem:[%s212 + $0xd8] sm:$0xff]
          %v241 = vld [vmem:[%s212 + $0xe0] sm:$0xff]
          %v242 = vld [vmem:[%s212 + $0xe8] sm:$0xff]
          %v243 = vld [vmem:[%s212 + $0xf0] sm:$0xff]
          %v244 = vld [vmem:[%s212 + $0xf8] sm:$0xff]
          %s245 = sshra.s32 %s211, 3
          %s246 = sand.u32 %s211, 7
          %s247 = smul.addr %s245, 4
          %s248 = scalar_lea.vmem %s176, %s247 [#allocation5]
          %v249 = vld [vmem:[%s248] sm:$0xf]
          %v250 = vld [vmem:[%s248 + $0x4] sm:$0xf]
          %v251 = vld [vmem:[%s248 + $0x8] sm:$0xf]
          %v252 = vld [vmem:[%s248 + $0xc] sm:$0xf]
          %v253 = vld [vmem:[%s248 + $0x10] sm:$0xf]
          %v254 = vld [vmem:[%s248 + $0x14] sm:$0xf]
          %v255 = vld [vmem:[%s248 + $0x18] sm:$0xf]
          %v256 = vld [vmem:[%s248 + $0x1c] sm:$0xf]
          %v257 = vld [vmem:[%s248 + $0x20] sm:$0xf]
          %v258 = vld [vmem:[%s248 + $0x24] sm:$0xf]
          %v259 = vld [vmem:[%s248 + $0x28] sm:$0xf]
          %v260 = vld [vmem:[%s248 + $0x2c] sm:$0xf]
          %v261 = vld [vmem:[%s248 + $0x30] sm:$0xf]
          %v262 = vld [vmem:[%s248 + $0x34] sm:$0xf]
          %v263 = vld [vmem:[%s248 + $0x38] sm:$0xf]
          %v264 = vld [vmem:[%s248 + $0x3c] sm:$0xf]
          %v265 = vld [vmem:[%s248 + $0x40] sm:$0xf]
          %v266 = vld [vmem:[%s248 + $0x44] sm:$0xf]
          %v267 = vld [vmem:[%s248 + $0x48] sm:$0xf]
          %v268 = vld [vmem:[%s248 + $0x4c] sm:$0xf]
          %v269 = vld [vmem:[%s248 + $0x50] sm:$0xf]
          %v270 = vld [vmem:[%s248 + $0x54] sm:$0xf]
          %v271 = vld [vmem:[%s248 + $0x58] sm:$0xf]
          %v272 = vld [vmem:[%s248 + $0x5c] sm:$0xf]
          %v273 = vld [vmem:[%s248 + $0x60] sm:$0xf]
          %v274 = vld [vmem:[%s248 + $0x64] sm:$0xf]
          %v275 = vld [vmem:[%s248 + $0x68] sm:$0xf]
          %v276 = vld [vmem:[%s248 + $0x6c] sm:$0xf]
          %v277 = vld [vmem:[%s248 + $0x70] sm:$0xf]
          %v278 = vld [vmem:[%s248 + $0x74] sm:$0xf]
          %v279 = vld [vmem:[%s248 + $0x78] sm:$0xf]
          %v280 = vld [vmem:[%s248 + $0x7c] sm:$0xf]
          %v281 = vunpack.c.l.bf16 %v249
          %v282 = vunpack.c.l.bf16 %v250
          %v283 = vunpack.c.l.bf16 %v251
          %v284 = vunpack.c.l.bf16 %v252
          %v285 = vunpack.c.l.bf16 %v253
          %v286 = vunpack.c.l.bf16 %v254
          %v287 = vunpack.c.l.bf16 %v255
          %v288 = vunpack.c.l.bf16 %v256
          %v289 = vunpack.c.l.bf16 %v257
          %v290 = vunpack.c.l.bf16 %v258
          %v291 = vunpack.c.l.bf16 %v259
          %v292 = vunpack.c.l.bf16 %v260
          %v293 = vunpack.c.l.bf16 %v261
          %v294 = vunpack.c.l.bf16 %v262
          %v295 = vunpack.c.l.bf16 %v263
          %v296 = vunpack.c.l.bf16 %v264
          %v297 = vunpack.c.l.bf16 %v265
          %v298 = vunpack.c.l.bf16 %v266
          %v299 = vunpack.c.l.bf16 %v267
          %v300 = vunpack.c.l.bf16 %v268
          %v301 = vunpack.c.l.bf16 %v269
          %v302 = vunpack.c.l.bf16 %v270
          %v303 = vunpack.c.l.bf16 %v271
          %v304 = vunpack.c.l.bf16 %v272
          %v305 = vunpack.c.l.bf16 %v273
          %v306 = vunpack.c.l.bf16 %v274
          %v307 = vunpack.c.l.bf16 %v275
          %v308 = vunpack.c.l.bf16 %v276
          %v309 = vunpack.c.l.bf16 %v277
          %v310 = vunpack.c.l.bf16 %v278
          %v311 = vunpack.c.l.bf16 %v279
          %v312 = vunpack.c.l.bf16 %v280
          %v313 = vmax.f32 %v213, 0.0
          %v314 = vmax.f32 %v214, 0.0
          %v315 = vmax.f32 %v215, 0.0
          %v316 = vmax.f32 %v216, 0.0
          %v317 = vmax.f32 %v217, 0.0
          %v318 = vmax.f32 %v218, 0.0
          %v319 = vmax.f32 %v219, 0.0
          %v320 = vmax.f32 %v220, 0.0
          %v321 = vmax.f32 %v221, 0.0
          %v322 = vmax.f32 %v222, 0.0
          %v323 = vmax.f32 %v223, 0.0
          %v324 = vmax.f32 %v224, 0.0
          %v325 = vmax.f32 %v225, 0.0
          %v326 = vmax.f32 %v226, 0.0
          %v327 = vmax.f32 %v227, 0.0
          %v328 = vmax.f32 %v228, 0.0
          %v329 = vmax.f32 %v229, 0.0
          %v330 = vmax.f32 %v230, 0.0
          %v331 = vmax.f32 %v231, 0.0
          %v332 = vmax.f32 %v232, 0.0
          %v333 = vmax.f32 %v233, 0.0
          %v334 = vmax.f32 %v234, 0.0
          %v335 = vmax.f32 %v235, 0.0
          %v336 = vmax.f32 %v236, 0.0
          %v337 = vmax.f32 %v237, 0.0
          %v338 = vmax.f32 %v238, 0.0
          %v339 = vmax.f32 %v239, 0.0
          %v340 = vmax.f32 %v240, 0.0
          %v341 = vmax.f32 %v241, 0.0
          %v342 = vmax.f32 %v242, 0.0
          %v343 = vmax.f32 %v243, 0.0
          %v344 = vmax.f32 %v244, 0.0
          %v345 = vmul.f32 %v213, %v281
          %v346 = vmul.f32 %v214, %v282
          %v347 = vmul.f32 %v215, %v283
          %v348 = vmul.f32 %v216, %v284
          %v349 = vmul.f32 %v217, %v285
          %v350 = vmul.f32 %v218, %v286
          %v351 = vmul.f32 %v219, %v287
          %v352 = vmul.f32 %v220, %v288
          %v353 = vmul.f32 %v221, %v289
          %v354 = vmul.f32 %v222, %v290
          %v355 = vmul.f32 %v223, %v291
          %v356 = vmul.f32 %v224, %v292
          %v357 = vmul.f32 %v225, %v293
          %v358 = vmul.f32 %v226, %v294
          %v359 = vmul.f32 %v227, %v295
          %v360 = vmul.f32 %v228, %v296
          %v361 = vmul.f32 %v229, %v297
          %v362 = vmul.f32 %v230, %v298
          %v363 = vmul.f32 %v231, %v299
          %v364 = vmul.f32 %v232, %v300
          %v365 = vmul.f32 %v233, %v301
          %v366 = vmul.f32 %v234, %v302
          %v367 = vmul.f32 %v235, %v303
          %v368 = vmul.f32 %v236, %v304
          %v369 = vmul.f32 %v237, %v305
          %v370 = vmul.f32 %v238, %v306
          %v371 = vmul.f32 %v239, %v307
          %v372 = vmul.f32 %v240, %v308
          %v373 = vmul.f32 %v241, %v309
          %v374 = vmul.f32 %v242, %v310
          %v375 = vmul.f32 %v243, %v311
          %v376 = vmul.f32 %v244, %v312
          %v377 = vsub.f32 %v313, %v345
          %v378 = vsub.f32 %v314, %v346
          %v379 = vsub.f32 %v315, %v347
          %v380 = vsub.f32 %v316, %v348
          %v381 = vsub.f32 %v317, %v349
          %v382 = vsub.f32 %v318, %v350
          %v383 = vsub.f32 %v319, %v351
          %v384 = vsub.f32 %v320, %v352
          %v385 = vsub.f32 %v321, %v353
          %v386 = vsub.f32 %v322, %v354
          %v387 = vsub.f32 %v323, %v355
          %v388 = vsub.f32 %v324, %v356
          %v389 = vsub.f32 %v325, %v357
          %v390 = vsub.f32 %v326, %v358
          %v391 = vsub.f32 %v327, %v359
          %v392 = vsub.f32 %v328, %v360
          %v393 = vsub.f32 %v329, %v361
          %v394 = vsub.f32 %v330, %v362
          %v395 = vsub.f32 %v331, %v363
          %v396 = vsub.f32 %v332, %v364
          %v397 = vsub.f32 %v333, %v365
          %v398 = vsub.f32 %v334, %v366
          %v399 = vsub.f32 %v335, %v367
          %v400 = vsub.f32 %v336, %v368
          %v401 = vsub.f32 %v337, %v369
          %v402 = vsub.f32 %v338, %v370
          %v403 = vsub.f32 %v339, %v371
          %v404 = vsub.f32 %v340, %v372
          %v405 = vsub.f32 %v341, %v373
          %v406 = vsub.f32 %v342, %v374
          %v407 = vsub.f32 %v343, %v375
          %v408 = vsub.f32 %v344, %v376
          %v409 = vand.u32 2147483647, %v213
          %v410 = vand.u32 2147483647, %v214
          %v411 = vand.u32 2147483647, %v215
          %v412 = vand.u32 2147483647, %v216
          %v413 = vand.u32 2147483647, %v217
          %v414 = vand.u32 2147483647, %v218
          %v415 = vand.u32 2147483647, %v219
          %v416 = vand.u32 2147483647, %v220
          %v417 = vand.u32 2147483647, %v221
          %v418 = vand.u32 2147483647, %v222
          %v419 = vand.u32 2147483647, %v223
          %v420 = vand.u32 2147483647, %v224
          %v421 = vand.u32 2147483647, %v225
          %v422 = vand.u32 2147483647, %v226
          %v423 = vand.u32 2147483647, %v227
          %v424 = vand.u32 2147483647, %v228
          %v425 = vand.u32 2147483647, %v229
          %v426 = vand.u32 2147483647, %v230
          %v427 = vand.u32 2147483647, %v231
          %v428 = vand.u32 2147483647, %v232
          %v429 = vand.u32 2147483647, %v233
          %v430 = vand.u32 2147483647, %v234
          %v431 = vand.u32 2147483647, %v235
          %v432 = vand.u32 2147483647, %v236
          %v433 = vand.u32 2147483647, %v237
          %v434 = vand.u32 2147483647, %v238
          %v435 = vand.u32 2147483647, %v239
          %v436 = vand.u32 2147483647, %v240
          %v437 = vand.u32 2147483647, %v241
          %v438 = vand.u32 2147483647, %v242
          %v439 = vand.u32 2147483647, %v243
          %v440 = vand.u32 2147483647, %v244
          %v441 = vsub.f32 0.0, %v409
          %v442 = vsub.f32 0.0, %v410
          %v443 = vsub.f32 0.0, %v411
          %v444 = vsub.f32 0.0, %v412
          %v445 = vsub.f32 0.0, %v413
          %v446 = vsub.f32 0.0, %v414
          %v447 = vsub.f32 0.0, %v415
          %v448 = vsub.f32 0.0, %v416
          %v449 = vsub.f32 0.0, %v417
          %v450 = vsub.f32 0.0, %v418
          %v451 = vsub.f32 0.0, %v419
          %v452 = vsub.f32 0.0, %v420
          %v453 = vsub.f32 0.0, %v421
          %v454 = vsub.f32 0.0, %v422
          %v455 = vsub.f32 0.0, %v423
          %v456 = vsub.f32 0.0, %v424
          %v457 = vsub.f32 0.0, %v425
          %v458 = vsub.f32 0.0, %v426
          %v459 = vsub.f32 0.0, %v427
          %v460 = vsub.f32 0.0, %v428
          %v461 = vsub.f32 0.0, %v429
          %v462 = vsub.f32 0.0, %v430
          %v463 = vsub.f32 0.0, %v431
          %v464 = vsub.f32 0.0, %v432
          %v465 = vsub.f32 0.0, %v433
          %v466 = vsub.f32 0.0, %v434
          %v467 = vsub.f32 0.0, %v435
          %v468 = vsub.f32 0.0, %v436
          %v469 = vsub.f32 0.0, %v437
          %v470 = vsub.f32 0.0, %v438
          %v471 = vsub.f32 0.0, %v439
          %v472 = vsub.f32 0.0, %v440
          %v473 = vmul.f32 %v441, 1.442695
          %v474 = vpow.pop %v473
          %v475 = vmul.f32 %v442, 1.442695
          %v476 = vpow.pop %v475
          %v477 = vmul.f32 %v443, 1.442695
          %v478 = vpow.pop %v477
          %v479 = vmul.f32 %v444, 1.442695
          %v480 = vpow.pop %v479
          %v481 = vmul.f32 %v445, 1.442695
          %v482 = vpow.pop %v481
          %v483 = vmul.f32 %v446, 1.442695
          %v484 = vpow.pop %v483
          %v485 = vmul.f32 %v447, 1.442695
          %v486 = vpow.pop %v485
          %v487 = vmul.f32 %v448, 1.442695
          %v488 = vpow.pop %v487
          %v489 = vmul.f32 %v449, 1.442695
          %v490 = vpow.pop %v489
          %v491 = vmul.f32 %v450, 1.442695
          %v492 = vpow.pop %v491
          %v493 = vmul.f32 %v451, 1.442695
          %v494 = vpow.pop %v493
          %v495 = vmul.f32 %v452, 1.442695
          %v496 = vpow.pop %v495
          %v497 = vmul.f32 %v453, 1.442695
          %v498 = vpow.pop %v497
          %v499 = vmul.f32 %v454, 1.442695
          %v500 = vpow.pop %v499
          %v501 = vmul.f32 %v455, 1.442695
          %v502 = vpow.pop %v501
          %v503 = vmul.f32 %v456, 1.442695
          %v504 = vpow.pop %v503
          %v505 = vmul.f32 %v457, 1.442695
          %v506 = vpow.pop %v505
          %v507 = vmul.f32 %v458, 1.442695
          %v508 = vpow.pop %v507
          %v509 = vmul.f32 %v459, 1.442695
          %v510 = vpow.pop %v509
          %v511 = vmul.f32 %v460, 1.442695
          %v512 = vpow.pop %v511
          %v513 = vmul.f32 %v461, 1.442695
          %v514 = vpow.pop %v513
          %v515 = vmul.f32 %v462, 1.442695
          %v516 = vpow.pop %v515
          %v517 = vmul.f32 %v463, 1.442695
          %v518 = vpow.pop %v517
          %v519 = vmul.f32 %v464, 1.442695
          %v520 = vpow.pop %v519
          %v521 = vmul.f32 %v465, 1.442695
          %v522 = vpow.pop %v521
          %v523 = vmul.f32 %v466, 1.442695
          %v524 = vpow.pop %v523
          %v525 = vmul.f32 %v467, 1.442695
          %v526 = vpow.pop %v525
          %v527 = vmul.f32 %v468, 1.442695
          %v528 = vpow.pop %v527
          %v529 = vmul.f32 %v469, 1.442695
          %v530 = vpow.pop %v529
          %v531 = vmul.f32 %v470, 1.442695
          %v532 = vpow.pop %v531
          %v533 = vmul.f32 %v471, 1.442695
          %v534 = vpow.pop %v533
          %v535 = vmul.f32 %v472, 1.442695
          %v536 = vpow.pop %v535
          %v537 = vadd.f32 %v474, 1.0
          %v538 = vlog2.pop %v537
          %v539 = vmul.f32 %v538, 0.6931472
          %v540 = vmul.f32 -0.5, %v474
          %v541 = vadd.f32 %v540, 1.0
          %v542 = vmul.f32 %v541, %v474
          %v543 = vand.u32 2147483647, %v474
          %vm544 = vcmp.lt.f32.partialorder %v543, 0.0004427343
          %v545 = vsel %vm544, %v542, %v539
          %v546 = vadd.f32 %v476, 1.0
          %v547 = vlog2.pop %v546
          %v548 = vmul.f32 %v547, 0.6931472
          %v549 = vmul.f32 -0.5, %v476
          %v550 = vadd.f32 %v549, 1.0
          %v551 = vmul.f32 %v550, %v476
          %v552 = vand.u32 2147483647, %v476
          %vm553 = vcmp.lt.f32.partialorder %v552, 0.0004427343
          %v554 = vsel %vm553, %v551, %v548
          %v555 = vadd.f32 %v478, 1.0
          %v556 = vlog2.pop %v555
          %v557 = vmul.f32 %v556, 0.6931472
          %v558 = vmul.f32 -0.5, %v478
          %v559 = vadd.f32 %v558, 1.0
          %v560 = vmul.f32 %v559, %v478
          %v561 = vand.u32 2147483647, %v478
          %vm562 = vcmp.lt.f32.partialorder %v561, 0.0004427343
          %v563 = vsel %vm562, %v560, %v557
          %v564 = vadd.f32 %v480, 1.0
          %v565 = vlog2.pop %v564
          %v566 = vmul.f32 %v565, 0.6931472
          %v567 = vmul.f32 -0.5, %v480
          %v568 = vadd.f32 %v567, 1.0
          %v569 = vmul.f32 %v568, %v480
          %v570 = vand.u32 2147483647, %v480
          %vm571 = vcmp.lt.f32.partialorder %v570, 0.0004427343
          %v572 = vsel %vm571, %v569, %v566
          %v573 = vadd.f32 %v482, 1.0
          %v574 = vlog2.pop %v573
          %v575 = vmul.f32 %v574, 0.6931472
          %v576 = vmul.f32 -0.5, %v482
          %v577 = vadd.f32 %v576, 1.0
          %v578 = vmul.f32 %v577, %v482
          %v579 = vand.u32 2147483647, %v482
          %vm580 = vcmp.lt.f32.partialorder %v579, 0.0004427343
          %v581 = vsel %vm580, %v578, %v575
          %v582 = vadd.f32 %v484, 1.0
          %v583 = vlog2.pop %v582
          %v584 = vmul.f32 %v583, 0.6931472
          %v585 = vmul.f32 -0.5, %v484
          %v586 = vadd.f32 %v585, 1.0
          %v587 = vmul.f32 %v586, %v484
          %v588 = vand.u32 2147483647, %v484
          %vm589 = vcmp.lt.f32.partialorder %v588, 0.0004427343
          %v590 = vsel %vm589, %v587, %v584
          %v591 = vadd.f32 %v486, 1.0
          %v592 = vlog2.pop %v591
          %v593 = vmul.f32 %v592, 0.6931472
          %v594 = vmul.f32 -0.5, %v486
          %v595 = vadd.f32 %v594, 1.0
          %v596 = vmul.f32 %v595, %v486
          %v597 = vand.u32 2147483647, %v486
          %vm598 = vcmp.lt.f32.partialorder %v597, 0.0004427343
          %v599 = vsel %vm598, %v596, %v593
          %v600 = vadd.f32 %v488, 1.0
          %v601 = vlog2.pop %v600
          %v602 = vmul.f32 %v601, 0.6931472
          %v603 = vmul.f32 -0.5, %v488
          %v604 = vadd.f32 %v603, 1.0
          %v605 = vmul.f32 %v604, %v488
          %v606 = vand.u32 2147483647, %v488
          %vm607 = vcmp.lt.f32.partialorder %v606, 0.0004427343
          %v608 = vsel %vm607, %v605, %v602
          %v609 = vadd.f32 %v490, 1.0
          %v610 = vlog2.pop %v609
          %v611 = vmul.f32 %v610, 0.6931472
          %v612 = vmul.f32 -0.5, %v490
          %v613 = vadd.f32 %v612, 1.0
          %v614 = vmul.f32 %v613, %v490
          %v615 = vand.u32 2147483647, %v490
          %vm616 = vcmp.lt.f32.partialorder %v615, 0.0004427343
          %v617 = vsel %vm616, %v614, %v611
          %v618 = vadd.f32 %v492, 1.0
          %v619 = vlog2.pop %v618
          %v620 = vmul.f32 %v619, 0.6931472
          %v621 = vmul.f32 -0.5, %v492
          %v622 = vadd.f32 %v621, 1.0
          %v623 = vmul.f32 %v622, %v492
          %v624 = vand.u32 2147483647, %v492
          %vm625 = vcmp.lt.f32.partialorder %v624, 0.0004427343
          %v626 = vsel %vm625, %v623, %v620
          %v627 = vadd.f32 %v494, 1.0
          %v628 = vlog2.pop %v627
          %v629 = vmul.f32 %v628, 0.6931472
          %v630 = vmul.f32 -0.5, %v494
          %v631 = vadd.f32 %v630, 1.0
          %v632 = vmul.f32 %v631, %v494
          %v633 = vand.u32 2147483647, %v494
          %vm634 = vcmp.lt.f32.partialorder %v633, 0.0004427343
          %v635 = vsel %vm634, %v632, %v629
          %v636 = vadd.f32 %v496, 1.0
          %v637 = vlog2.pop %v636
          %v638 = vmul.f32 %v637, 0.6931472
          %v639 = vmul.f32 -0.5, %v496
          %v640 = vadd.f32 %v639, 1.0
          %v641 = vmul.f32 %v640, %v496
          %v642 = vand.u32 2147483647, %v496
          %vm643 = vcmp.lt.f32.partialorder %v642, 0.0004427343
          %v644 = vsel %vm643, %v641, %v638
          %v645 = vadd.f32 %v498, 1.0
          %v646 = vlog2.pop %v645
          %v647 = vmul.f32 %v646, 0.6931472
          %v648 = vmul.f32 -0.5, %v498
          %v649 = vadd.f32 %v648, 1.0
          %v650 = vmul.f32 %v649, %v498
          %v651 = vand.u32 2147483647, %v498
          %vm652 = vcmp.lt.f32.partialorder %v651, 0.0004427343
          %v653 = vsel %vm652, %v650, %v647
          %v654 = vadd.f32 %v500, 1.0
          %v655 = vlog2.pop %v654
          %v656 = vmul.f32 %v655, 0.6931472
          %v657 = vmul.f32 -0.5, %v500
          %v658 = vadd.f32 %v657, 1.0
          %v659 = vmul.f32 %v658, %v500
          %v660 = vand.u32 2147483647, %v500
          %vm661 = vcmp.lt.f32.partialorder %v660, 0.0004427343
          %v662 = vsel %vm661, %v659, %v656
          %v663 = vadd.f32 %v502, 1.0
          %v664 = vlog2.pop %v663
          %v665 = vmul.f32 %v664, 0.6931472
          %v666 = vmul.f32 -0.5, %v502
          %v667 = vadd.f32 %v666, 1.0
          %v668 = vmul.f32 %v667, %v502
          %v669 = vand.u32 2147483647, %v502
          %vm670 = vcmp.lt.f32.partialorder %v669, 0.0004427343
          %v671 = vsel %vm670, %v668, %v665
          %v672 = vadd.f32 %v504, 1.0
          %v673 = vlog2.pop %v672
          %v674 = vmul.f32 %v673, 0.6931472
          %v675 = vmul.f32 -0.5, %v504
          %v676 = vadd.f32 %v675, 1.0
          %v677 = vmul.f32 %v676, %v504
          %v678 = vand.u32 2147483647, %v504
          %vm679 = vcmp.lt.f32.partialorder %v678, 0.0004427343
          %v680 = vsel %vm679, %v677, %v674
          %v681 = vadd.f32 %v506, 1.0
          %v682 = vlog2.pop %v681
          %v683 = vmul.f32 %v682, 0.6931472
          %v684 = vmul.f32 -0.5, %v506
          %v685 = vadd.f32 %v684, 1.0
          %v686 = vmul.f32 %v685, %v506
          %v687 = vand.u32 2147483647, %v506
          %vm688 = vcmp.lt.f32.partialorder %v687, 0.0004427343
          %v689 = vsel %vm688, %v686, %v683
          %v690 = vadd.f32 %v508, 1.0
          %v691 = vlog2.pop %v690
          %v692 = vmul.f32 %v691, 0.6931472
          %v693 = vmul.f32 -0.5, %v508
          %v694 = vadd.f32 %v693, 1.0
          %v695 = vmul.f32 %v694, %v508
          %v696 = vand.u32 2147483647, %v508
          %vm697 = vcmp.lt.f32.partialorder %v696, 0.0004427343
          %v698 = vsel %vm697, %v695, %v692
          %v699 = vadd.f32 %v510, 1.0
          %v700 = vlog2.pop %v699
          %v701 = vmul.f32 %v700, 0.6931472
          %v702 = vmul.f32 -0.5, %v510
          %v703 = vadd.f32 %v702, 1.0
          %v704 = vmul.f32 %v703, %v510
          %v705 = vand.u32 2147483647, %v510
          %vm706 = vcmp.lt.f32.partialorder %v705, 0.0004427343
          %v707 = vsel %vm706, %v704, %v701
          %v708 = vadd.f32 %v512, 1.0
          %v709 = vlog2.pop %v708
          %v710 = vmul.f32 %v709, 0.6931472
          %v711 = vmul.f32 -0.5, %v512
          %v712 = vadd.f32 %v711, 1.0
          %v713 = vmul.f32 %v712, %v512
          %v714 = vand.u32 2147483647, %v512
          %vm715 = vcmp.lt.f32.partialorder %v714, 0.0004427343
          %v716 = vsel %vm715, %v713, %v710
          %v717 = vadd.f32 %v514, 1.0
          %v718 = vlog2.pop %v717
          %v719 = vmul.f32 %v718, 0.6931472
          %v720 = vmul.f32 -0.5, %v514
          %v721 = vadd.f32 %v720, 1.0
          %v722 = vmul.f32 %v721, %v514
          %v723 = vand.u32 2147483647, %v514
          %vm724 = vcmp.lt.f32.partialorder %v723, 0.0004427343
          %v725 = vsel %vm724, %v722, %v719
          %v726 = vadd.f32 %v516, 1.0
          %v727 = vlog2.pop %v726
          %v728 = vmul.f32 %v727, 0.6931472
          %v729 = vmul.f32 -0.5, %v516
          %v730 = vadd.f32 %v729, 1.0
          %v731 = vmul.f32 %v730, %v516
          %v732 = vand.u32 2147483647, %v516
          %vm733 = vcmp.lt.f32.partialorder %v732, 0.0004427343
          %v734 = vsel %vm733, %v731, %v728
          %v735 = vadd.f32 %v518, 1.0
          %v736 = vlog2.pop %v735
          %v737 = vmul.f32 %v736, 0.6931472
          %v738 = vmul.f32 -0.5, %v518
          %v739 = vadd.f32 %v738, 1.0
          %v740 = vmul.f32 %v739, %v518
          %v741 = vand.u32 2147483647, %v518
          %vm742 = vcmp.lt.f32.partialorder %v741, 0.0004427343
          %v743 = vsel %vm742, %v740, %v737
          %v744 = vadd.f32 %v520, 1.0
          %v745 = vlog2.pop %v744
          %v746 = vmul.f32 %v745, 0.6931472
          %v747 = vmul.f32 -0.5, %v520
          %v748 = vadd.f32 %v747, 1.0
          %v749 = vmul.f32 %v748, %v520
          %v750 = vand.u32 2147483647, %v520
          %vm751 = vcmp.lt.f32.partialorder %v750, 0.0004427343
          %v752 = vsel %vm751, %v749, %v746
          %v753 = vadd.f32 %v522, 1.0
          %v754 = vlog2.pop %v753
          %v755 = vmul.f32 %v754, 0.6931472
          %v756 = vmul.f32 -0.5, %v522
          %v757 = vadd.f32 %v756, 1.0
          %v758 = vmul.f32 %v757, %v522
          %v759 = vand.u32 2147483647, %v522
          %vm760 = vcmp.lt.f32.partialorder %v759, 0.0004427343
          %v761 = vsel %vm760, %v758, %v755
          %v762 = vadd.f32 %v524, 1.0
          %v763 = vlog2.pop %v762
          %v764 = vmul.f32 %v763, 0.6931472
          %v765 = vmul.f32 -0.5, %v524
          %v766 = vadd.f32 %v765, 1.0
          %v767 = vmul.f32 %v766, %v524
          %v768 = vand.u32 2147483647, %v524
          %vm769 = vcmp.lt.f32.partialorder %v768, 0.0004427343
          %v770 = vsel %vm769, %v767, %v764
          %v771 = vadd.f32 %v526, 1.0
          %v772 = vlog2.pop %v771
          %v773 = vmul.f32 %v772, 0.6931472
          %v774 = vmul.f32 -0.5, %v526
          %v775 = vadd.f32 %v774, 1.0
          %v776 = vmul.f32 %v775, %v526
          %v777 = vand.u32 2147483647, %v526
          %vm778 = vcmp.lt.f32.partialorder %v777, 0.0004427343
          %v779 = vsel %vm778, %v776, %v773
          %v780 = vadd.f32 %v528, 1.0
          %v781 = vlog2.pop %v780
          %v782 = vmul.f32 %v781, 0.6931472
          %v783 = vmul.f32 -0.5, %v528
          %v784 = vadd.f32 %v783, 1.0
          %v785 = vmul.f32 %v784, %v528
          %v786 = vand.u32 2147483647, %v528
          %vm787 = vcmp.lt.f32.partialorder %v786, 0.0004427343
          %v788 = vsel %vm787, %v785, %v782
          %v789 = vadd.f32 %v530, 1.0
          %v790 = vlog2.pop %v789
          %v791 = vmul.f32 %v790, 0.6931472
          %v792 = vmul.f32 -0.5, %v530
          %v793 = vadd.f32 %v792, 1.0
          %v794 = vmul.f32 %v793, %v530
          %v795 = vand.u32 2147483647, %v530
          %vm796 = vcmp.lt.f32.partialorder %v795, 0.0004427343
          %v797 = vsel %vm796, %v794, %v791
          %v798 = vadd.f32 %v532, 1.0
          %v799 = vlog2.pop %v798
          %v800 = vmul.f32 %v799, 0.6931472
          %v801 = vmul.f32 -0.5, %v532
          %v802 = vadd.f32 %v801, 1.0
          %v803 = vmul.f32 %v802, %v532
          %v804 = vand.u32 2147483647, %v532
          %vm805 = vcmp.lt.f32.partialorder %v804, 0.0004427343
          %v806 = vsel %vm805, %v803, %v800
          %v807 = vadd.f32 %v534, 1.0
          %v808 = vlog2.pop %v807
          %v809 = vmul.f32 %v808, 0.6931472
          %v810 = vmul.f32 -0.5, %v534
          %v811 = vadd.f32 %v810, 1.0
          %v812 = vmul.f32 %v811, %v534
          %v813 = vand.u32 2147483647, %v534
          %vm814 = vcmp.lt.f32.partialorder %v813, 0.0004427343
          %v815 = vsel %vm814, %v812, %v809
          %v816 = vadd.f32 %v536, 1.0
          %v817 = vlog2.pop %v816
          %v818 = vmul.f32 %v817, 0.6931472
          %v819 = vmul.f32 -0.5, %v536
          %v820 = vadd.f32 %v819, 1.0
          %v821 = vmul.f32 %v820, %v536
          %v822 = vand.u32 2147483647, %v536
          %vm823 = vcmp.lt.f32.partialorder %v822, 0.0004427343
          %v824 = vsel %vm823, %v821, %v818
          %v825 = vadd.f32 %v377, %v545
          %v826 = vadd.f32 %v378, %v554
          %v827 = vadd.f32 %v379, %v563
          %v828 = vadd.f32 %v380, %v572
          %v829 = vadd.f32 %v381, %v581
          %v830 = vadd.f32 %v382, %v590
          %v831 = vadd.f32 %v383, %v599
          %v832 = vadd.f32 %v384, %v608
          %v833 = vadd.f32 %v385, %v617
          %v834 = vadd.f32 %v386, %v626
          %v835 = vadd.f32 %v387, %v635
          %v836 = vadd.f32 %v388, %v644
          %v837 = vadd.f32 %v389, %v653
          %v838 = vadd.f32 %v390, %v662
          %v839 = vadd.f32 %v391, %v671
          %v840 = vadd.f32 %v392, %v680
          %v841 = vadd.f32 %v393, %v689
          %v842 = vadd.f32 %v394, %v698
          %v843 = vadd.f32 %v395, %v707
          %v844 = vadd.f32 %v396, %v716
          %v845 = vadd.f32 %v397, %v725
          %v846 = vadd.f32 %v398, %v734
          %v847 = vadd.f32 %v399, %v743
          %v848 = vadd.f32 %v400, %v752
          %v849 = vadd.f32 %v401, %v761
          %v850 = vadd.f32 %v402, %v770
          %v851 = vadd.f32 %v403, %v779
          %v852 = vadd.f32 %v404, %v788
          %v853 = vadd.f32 %v405, %v797
          %v854 = vadd.f32 %v406, %v806
          %v855 = vadd.f32 %v407, %v815
          %v856 = vadd.f32 %v408, %v824
          %v857 = vadd.f32 %v825, %v826
          %v858 = vadd.f32 %v857, %v827
          %v859 = vadd.f32 %v858, %v828
          %v860 = vadd.f32 %v859, %v829
          %v861 = vadd.f32 %v860, %v830
          %v862 = vadd.f32 %v861, %v831
          %v863 = vadd.f32 %v862, %v832
          %v864 = vadd.f32 %v863, %v833
          %v865 = vadd.f32 %v864, %v834
          %v866 = vadd.f32 %v865, %v835
          %v867 = vadd.f32 %v866, %v836
          %v868 = vadd.f32 %v867, %v837
          %v869 = vadd.f32 %v868, %v838
          %v870 = vadd.f32 %v869, %v839
          %v871 = vadd.f32 %v870, %v840
          %v872 = vadd.f32 %v871, %v841
          %v873 = vadd.f32 %v872, %v842
          %v874 = vadd.f32 %v873, %v843
          %v875 = vadd.f32 %v874, %v844
          %v876 = vadd.f32 %v875, %v845
          %v877 = vadd.f32 %v876, %v846
          %v878 = vadd.f32 %v877, %v847
          %v879 = vadd.f32 %v878, %v848
          %v880 = vadd.f32 %v879, %v849
          %v881 = vadd.f32 %v880, %v850
          %v882 = vadd.f32 %v881, %v851
          %v883 = vadd.f32 %v882, %v852
          %v884 = vadd.f32 %v883, %v853
          %v885 = vadd.f32 %v884, %v854
          %v886 = vadd.f32 %v885, %v855
          %v887 = vadd.f32 %v886, %v856
          %v888 = vadd.f32 %v210, %v887
        $region41: #{tpu_custom_call.1} parent=27 // loop_footer
          %s209 = sadd.s32 1, %s205
        $region42: #{tpu_custom_call.1} parent=27 // loop_footer_branch
          %204 = sbr.rel target = $region38
        $region43: #{tpu_custom_call.1} parent=27 // loop_exit
          _
        %889 = vst [vmem:[%s201] sm:$0xff] %v210
        %s890 = sand.u32 %s82, 1
        %s891 = scalar_lea.sflag [#allocation4], %s890
        %s892 = sand.u32 %s82, 1
        %s893 = smul.addr %s892, 8
        %s894 = scalar_lea.vmem [#allocation7], %s893
        // Predicated region
        $region44: #{tpu_custom_call.1} parent=27 // pred_check
          %p895 = pneg %p92
        $region45: #{tpu_custom_call.1} parent=27 // pred_check_branch
          %897 = sbr.rel (%p895) target = $region47
        $region46: #{tpu_custom_call.1} parent=27 // pred_region
          %s899 = ssub.s32 128, 128
          %900 = vsyncadd %s891, %s899
          %s901 = smul.addr %s22, 128
          %s902 = scalar_lea.hbm %s2, %s901
          %s904 = sshll.u32 %s894, 4
          %s905 = int_to_ptr.vmem [resolvable:$true] %s904
          %907 = dma.vmem_to_hbm [thread:$0]  %s905, 128, %s902, %s891
        $region47: #{tpu_custom_call.1} parent=27 // pred_fallthru
          _
      $region28: #{tpu_custom_call.1} parent=5 // pred_fallthru
        _
      %p908 = scmp.le.s32.totalorder 2, %s17
      // Predicated region
      $region48: #{tpu_custom_call.1} parent=5 // pred_check
        %p909 = pneg %p908
      $region49: #{tpu_custom_call.1} parent=5 // pred_check_branch
        %911 = sbr.rel (%p909) target = $region51
      $region50: #{tpu_custom_call.1} parent=5 // pred_region
        %s912 = ssub.s32 %s17, 2
        // Predicated region
        $region52: #{tpu_custom_call.1} parent=50 // pred_check
          %p913 = pneg %p98
        $region53: #{tpu_custom_call.1} parent=50 // pred_check_branch
          %915 = sbr.rel (%p913) target = $region55
        $region54: #{tpu_custom_call.1} parent=50 // pred_region
          %s916 = sand.u32 %s83, 1
          %s917 = scalar_lea.sflag [#allocation4], %s916
          %s918 = sand.u32 %s83, 1
          %s919 = smul.addr %s918, 8
          %s920 = scalar_lea.vmem [#allocation7], %s919
          %921 = dma.done %s917, 128
        $region55: #{tpu_custom_call.1} parent=50 // pred_fallthru
          _
      $region51: #{tpu_custom_call.1} parent=5 // pred_fallthru
        _
    $region6: #{tpu_custom_call.1} parent=1 // loop_footer
      %s21 = sadd.s32 1, %s17
    $region7: #{tpu_custom_call.1} parent=1 // loop_footer_branch
      %16 = sbr.rel target = $region3
    $region8: #{tpu_custom_call.1} parent=1 // loop_exit
      _
    %922 = vsyncpa [#allocation3], 1
    %s923 = scalar_lea.sflag [#allocation3], 1
    %924 = vsyncpa %s923, 1
    %925 = vsyncpa [#allocation6], 1
    %s926 = scalar_lea.sflag [#allocation6], 1
    %927 = vsyncpa %s926, 1
    %928 = vsyncpa [#allocation4], 1
    %s929 = scalar_lea.sflag [#allocation4], 1
    %930 = vsyncpa %s929, 1

</llo_original>
